<compile_context>
chip_gen: v6e
topology: v6e:2x2x1
jax: 0.10.0
libtpu: 0.0.40
codegen_flags: <defaults>
</compile_context>

<pallas_src>
import jax
import jax.numpy as jnp
from jax.experimental import pallas as pl
from jax.experimental.pallas import tpu as pltpu


def _round_up(x, m):
    return ((x + m - 1) // m) * m


# ----------------------------------------------------------------------------
# Kernel bodies
# ----------------------------------------------------------------------------
def _mlp_head_body(x_ref, w1_ref, w2_ref, w3_ref, wh_ref, bh_ref, out_ref,
                   scale, bias):
    """relu(x W1) -> relu(. W2) -> relu(. W3) -> tanh(. (P Wm) + b) * s + o."""
    cdt = w1_ref.dtype  # MXU input dtype (bf16 on the fast path)

    h = jnp.dot(x_ref[...], w1_ref[...], preferred_element_type=jnp.float32)
    h = jnp.maximum(h, 0.0)
    h = jnp.dot(h.astype(cdt), w2_ref[...], preferred_element_type=jnp.float32)
    h = jnp.maximum(h, 0.0)
    h = jnp.dot(h.astype(cdt), w3_ref[...], preferred_element_type=jnp.float32)
    h = jnp.maximum(h, 0.0)

    # Task head with the orthogonal projection folded in.
    m = jnp.dot(h.astype(cdt), wh_ref[...], preferred_element_type=jnp.float32)
    m = m + bh_ref[...]

    y = jnp.tanh(m)
    if scale is not None:
        y = y * scale
    if bias is not None:
        y = y + bias
    out_ref[...] = y.astype(out_ref.dtype)


def _make_scalar_sb_kernel(scale, bias):
    """Kernel with action scale/bias baked in as compile-time constants."""
    s = None if float(scale) == 1.0 else float(scale)
    b = None if float(bias) == 0.0 else float(bias)

    def kernel(tid_ref, x_ref, w1_ref, w2_ref, w3_ref, wh_ref, bh_ref, out_ref):
        del tid_ref  # consumed only by the BlockSpec index_maps
        _mlp_head_body(x_ref, w1_ref, w2_ref, w3_ref, wh_ref, bh_ref, out_ref,
                       s, b)

    return kernel


def _vector_sb_kernel(tid_ref, x_ref, w1_ref, w2_ref, w3_ref, wh_ref, bh_ref,
                      sb_ref, out_ref):
    """Kernel variant for per-action scale/bias (tiny resident VMEM tile)."""
    del tid_ref
    _mlp_head_body(x_ref, w1_ref, w2_ref, w3_ref, wh_ref, bh_ref, out_ref,
                   sb_ref[0:1, :], sb_ref[1:2, :])


# ----------------------------------------------------------------------------
# One-time parameter preparation; returns the per-call forward callable.
# ----------------------------------------------------------------------------
def _is_scalar_like(v):
    if isinstance(v, (int, float)):
        return True
    arr = jnp.asarray(v)
    return arr.size == 1


def prepare_clos_policy(w1, w2, w3, projs, head_ws, head_bs,
                        action_scale=1.0, action_bias=0.0, *,
                        compute_dtype=jnp.bfloat16, out_dtype=jnp.bfloat16,
                        block_b=512):
    """One-time weight prep for the fused CLOS deterministic-policy forward.

    w1      : [num_inputs, hidden]       (shared_linear1.weight.T)
    w2      : [hidden, hidden]           (shared_linear2.weight.T)
    w3      : [hidden, shared_feature]   (shared_linear3.weight.T)
    projs   : list of [SF, SF]           (projection matrices, one per task)
    head_ws : list of [SF, num_actions]  (mean_linears[i].weight.T)
    head_bs : list of [1, num_actions]   (mean_linears[i].bias)

    Returns `forward(state, task_id, trim_output=True)` -> mean [B, num_actions].
    (Users may additionally wrap `forward` in jax.jit.)
    """
    num_tasks = len(projs)
    num_inputs, hidden = w1.shape
    SF = w3.shape[1]
    NA = head_ws[0].shape[1]
    NA_pad = max(128, _round_up(NA, 128))  # lane-dense output stores

    # --- fold projection into head weight (exact: no nonlinearity between) ---
    wh = jnp.stack([projs[t].astype(jnp.float32) @ head_ws[t].astype(jnp.float32)
                    for t in range(num_tasks)])                      # [T, SF, NA]
    wh = jnp.pad(wh, ((0, 0), (0, 0), (0, NA_pad - NA)))
    bh = jnp.stack([jnp.reshape(head_bs[t].astype(jnp.float32), (1, NA))
                    for t in range(num_tasks)])                      # [T, 1, NA]
    bh = jnp.pad(bh, ((0, 0), (0, 0), (0, NA_pad - NA)))

    # --- compute-dtype casts, done once ---
    w1c = w1.astype(compute_dtype)
    w2c = w2.astype(compute_dtype)
    w3c = w3.astype(compute_dtype)
    whc = wh.astype(compute_dtype)
    bhc = bh  # bias stays f32 (added after the f32 accumulation)

    # --- action scale / bias: scalars -> compile-time constants; vectors ->
    #     tiny resident VMEM tile ---
    if _is_scalar_like(action_scale) and _is_scalar_like(action_bias):
        kernel = _make_scalar_sb_kernel(
            float(jnp.asarray(action_scale).reshape(())),
            float(jnp.asarray(action_bias).reshape(())))
        sb = None
    else:
        sc = jnp.asarray(action_scale, jnp.float32).reshape(-1)
        bc = jnp.asarray(action_bias, jnp.float32).reshape(-1)
        if sc.shape[0] not in (1, NA) or bc.shape[0] not in (1, NA):
            raise ValueError(
                f"action_scale/action_bias must be scalars or length-{NA} "
                f"vectors; got lengths {sc.shape[0]} / {bc.shape[0]}")
        sc = jnp.broadcast_to(sc, (NA,))
        bc = jnp.broadcast_to(bc, (NA,))
        sb = jnp.zeros((2, NA_pad), jnp.float32)
        sb = sb.at[0, :NA].set(sc).at[1, :NA].set(bc)
        kernel = _vector_sb_kernel

    # Force the prepared arrays to materialize now (not on the first call).
    prepared = jax.block_until_ready((w1c, w2c, w3c, whc, bhc) +
                                     (() if sb is None else (sb,)))
    del prepared

    def forward(state, task_id, trim_output=True):
        B = state.shape[0]
        # Batch tile: multiple of 16 (bf16 sublane packing; also /8 for f32).
        # min(block_b, round_up(ceil(B/2),16)) guarantees >=2 grid steps for
        # large B so the "parallel" axis shards across v7x's two TensorCores.
        TB = min(block_b, _round_up(max(1, -(-B // 2)), 16))
        B_pad = _round_up(B, TB)
        grid = (B_pad // TB,)

        xc = state.astype(compute_dtype)
        if B_pad != B:
            xc = jnp.pad(xc, ((0, B_pad - B), (0, 0)))

        tid = jnp.asarray([task_id], jnp.int32)

        in_specs = [
            # state: batch-tiled, pipelined across the grid
            pl.BlockSpec((TB, num_inputs), lambda i, t: (i, 0)),
            # shared weights: resident across all batch tiles
            pl.BlockSpec((num_inputs, hidden), lambda i, t: (0, 0)),
            pl.BlockSpec((hidden, hidden), lambda i, t: (0, 0)),
            pl.BlockSpec((hidden, SF), lambda i, t: (0, 0)),
            # per-task folded head weight / bias, selected by task_id
            pl.BlockSpec((None, SF, NA_pad), lambda i, t: (t[0], 0, 0)),
            pl.BlockSpec((None, 1, NA_pad), lambda i, t: (t[0], 0, 0)),
        ]
        args = (tid, xc, w1c, w2c, w3c, whc, bhc)
        if sb is not None:
            in_specs.append(pl.BlockSpec((2, NA_pad), lambda i, t: (0, 0)))
            args = args + (sb,)

        out = pl.pallas_call(
            kernel,
            out_shape=jax.ShapeDtypeStruct((B_pad, NA_pad), out_dtype),
            grid_spec=pltpu.PrefetchScalarGridSpec(
                num_scalar_prefetch=1,
                grid=grid,
                in_specs=in_specs,
                out_specs=pl.BlockSpec((TB, NA_pad), lambda i, t: (i, 0)),
            ),
            compiler_params=pltpu.CompilerParams(
                dimension_semantics=("parallel",)),
        )(*args)

        if trim_output:
            # Rows >= B and lanes >= NA hold padding garbage; trim them.
            return out[:B, :NA]
        return out  # [B_pad, NA_pad]; caller must mask rows >= B, lanes >= NA

    return forward


# ----------------------------------------------------------------------------
# Deterministic parameter construction (mirrors the PyTorch __init__)
# ----------------------------------------------------------------------------
def xavier_uniform(key, fan_in, fan_out):
    # torch.nn.init.xavier_uniform_ with gain=1: U(-a, a), a = sqrt(6/(fi+fo))
    a = jnp.sqrt(6.0 / (fan_in + fan_out))
    return jax.random.uniform(key, (fan_in, fan_out), jnp.float32, -a, a)


def generate_projection_matrices(key, num_tasks, feature_dim):
    """Orthogonal-subspace projections P_i = Q_i Q_i^T, sum_i P_i = I."""
    assert feature_dim % num_tasks == 0
    g = jax.random.normal(key, (feature_dim, feature_dim), jnp.float32)
    q, _ = jnp.linalg.qr(g)
    sub = feature_dim // num_tasks
    projs = []
    for i in range(num_tasks):
        qi = q[:, i * sub:(i + 1) * sub]
        projs.append(qi @ qi.T)
    return projs


def build_params(key, num_inputs, num_actions, hidden_dim, num_tasks,
                 shared_feature_dim):
    keys = jax.random.split(key, 4 + 2 * num_tasks)
    w1 = xavier_uniform(keys[0], num_inputs, hidden_dim)
    w2 = xavier_uniform(keys[1], hidden_dim, hidden_dim)
    w3 = xavier_uniform(keys[2], hidden_dim, shared_feature_dim)
    projs = generate_projection_matrices(keys[3], num_tasks, shared_feature_dim)
    head_w, head_b = [], []
    bound = 1.0 / jnp.sqrt(shared_feature_dim)
    for i in range(num_tasks):
        head_w.append(xavier_uniform(keys[4 + 2 * i], shared_feature_dim,
                                     num_actions))
        # PyTorch default Linear bias init: U(-1/sqrt(fan_in), 1/sqrt(fan_in))
        head_b.append(jax.random.uniform(keys[5 + 2 * i], (1, num_actions),
                                         jnp.float32, -bound, bound))
    return dict(w1=w1, w2=w2, w3=w3, projs=projs, head_w=head_w, head_b=head_b)


# ----------------------------------------------------------------------------
if __name__ == "__main__":
    B = 8
    num_inputs = 32
    num_actions = 4
    hidden_dim = 32
    num_tasks = 2
    shared_feature_dim = 256
    task_id = 1

    key = jax.random.PRNGKey(0)
    pkey, skey = jax.random.split(key)
    params = build_params(pkey, num_inputs, num_actions, hidden_dim,
                          num_tasks, shared_feature_dim)
    state = jax.random.normal(skey, (B, num_inputs), jnp.float32)

    def reference(state, tid, scale, bias):
        h = jnp.maximum(state @ params["w1"], 0.0)
        h = jnp.maximum(h @ params["w2"], 0.0)
        h = jnp.maximum(h @ params["w3"], 0.0)
        h = h @ params["projs"][tid]
        return (jnp.tanh(h @ params["head_w"][tid] + params["head_b"][tid])
                * scale + bias)

    ref = reference(state, task_id, 1.0, 0.0)

    # 1) f32 compute + f32 output: tight check (fold is exact up to f32 order).
    fwd_f32 = prepare_clos_policy(
        params["w1"], params["w2"], params["w3"], params["projs"],
        params["head_w"], params["head_b"], 1.0, 0.0,
        compute_dtype=jnp.float32, out_dtype=jnp.float32)
    mean_f32 = jax.block_until_ready(fwd_f32(state, task_id))
    assert mean_f32.shape == (B, num_actions)
    assert jnp.allclose(mean_f32, ref, atol=1e-4, rtol=1e-4)

    # 2) bf16 fast path (bf16 MXU inputs, f32 accumulation, bf16 output):
    #    looser tolerance for the deliberate precision trade.
    fwd_bf16 = prepare_clos_policy(
        params["w1"], params["w2"], params["w3"], params["projs"],
        params["head_w"], params["head_b"], 1.0, 0.0)
    mean_bf16 = jax.block_until_ready(fwd_bf16(state, task_id))
    assert mean_bf16.shape == (B, num_actions)
    assert jnp.allclose(mean_bf16.astype(jnp.float32), ref, atol=4e-2, rtol=4e-2)

    # 3) per-action action_scale / action_bias (vector VMEM path), task 0.
    a_scale = jnp.array([1.0, 0.5, 2.0, 1.5], jnp.float32)
    a_bias = jnp.array([0.0, 0.1, -0.1, 0.2], jnp.float32)
    ref_v = reference(state, 0, a_scale, a_bias)
    fwd_vec = prepare_clos_policy(
        params["w1"], params["w2"], params["w3"], params["projs"],
        params["head_w"], params["head_b"], a_scale, a_bias)
    mean_vec = jax.block_until_ready(fwd_vec(state, 0))
    assert mean_vec.shape == (B, num_actions)
    assert jnp.allclose(mean_vec.astype(jnp.float32), ref_v, atol=6e-2, rtol=6e-2)

    print("KERNEL_OK")
</pallas_src>

<mosaic_0001>
module attributes {stable_mosaic.version = 11 : i64} {
  func.func @kernel(%arg0: i32, %arg1: memref<1xi32, #tpu.memory_space<smem>>, %arg2: memref<16x32xf32, #tpu.memory_space<vmem>>, %arg3: memref<32x32xf32, #tpu.memory_space<vmem>>, %arg4: memref<32x32xf32, #tpu.memory_space<vmem>>, %arg5: memref<32x256xf32, #tpu.memory_space<vmem>>, %arg6: memref<1x256x128xf32, #tpu.memory_space<vmem>>, %arg7: memref<1x1x128xf32, #tpu.memory_space<vmem>>, %arg8: memref<16x128xf32, #tpu.memory_space<vmem>>) attributes {dimension_semantics = [#tpu.dimension_semantics<parallel>], iteration_bounds = array<i64: 1>, scalar_prefetch = 1 : i64, scratch_operands = 0 : i64, tpu.core_type = #tpu.core_type<tc>, window_params = [{transform_indices = @transform_0, window_bounds = array<i64: 16, 32>}, {pipeline_mode = #tpu.pipeline_mode<synchronous>, transform_indices = @transform_1, window_bounds = array<i64: 32, 32>}, {pipeline_mode = #tpu.pipeline_mode<synchronous>, transform_indices = @transform_2, window_bounds = array<i64: 32, 32>}, {pipeline_mode = #tpu.pipeline_mode<synchronous>, transform_indices = @transform_3, window_bounds = array<i64: 32, 256>}, {transform_indices = @transform_4, window_bounds = array<i64: 1, 256, 128>}, {transform_indices = @transform_5, window_bounds = array<i64: 1, 1, 128>}, {transform_indices = @transform_6, window_bounds = array<i64: 16, 128>}]} {
    %c0 = arith.constant 0 : index
    %c0_0 = arith.constant 0 : index
    %0 = vector.load %arg2[%c0, %c0_0] : memref<16x32xf32, #tpu.memory_space<vmem>>, vector<16x32xf32>
    %c0_1 = arith.constant 0 : index
    %c0_2 = arith.constant 0 : index
    %1 = vector.load %arg3[%c0_1, %c0_2] : memref<32x32xf32, #tpu.memory_space<vmem>>, vector<32x32xf32>
    %cst = arith.constant dense<0.000000e+00> : vector<16x32xf32>
    %2 = tpu.matmul %0, %1, %cst {dimension_numbers = #tpu.dot_dimension_numbers<[1], [0], [0], [1], [0, 0, 1, 1], [], []>} : vector<16x32xf32>, vector<32x32xf32>, vector<16x32xf32> -> vector<16x32xf32>
    %cst_3 = arith.constant 0.000000e+00 : f32
    %3 = vector.broadcast %cst_3 : f32 to vector<16x32xf32>
    %4 = arith.maximumf %2, %3 : vector<16x32xf32>
    %c0_4 = arith.constant 0 : index
    %c0_5 = arith.constant 0 : index
    %5 = vector.load %arg4[%c0_4, %c0_5] : memref<32x32xf32, #tpu.memory_space<vmem>>, vector<32x32xf32>
    %cst_6 = arith.constant dense<0.000000e+00> : vector<16x32xf32>
    %6 = tpu.matmul %4, %5, %cst_6 {dimension_numbers = #tpu.dot_dimension_numbers<[1], [0], [0], [1], [0, 0, 1, 1], [], []>} : vector<16x32xf32>, vector<32x32xf32>, vector<16x32xf32> -> vector<16x32xf32>
    %cst_7 = arith.constant 0.000000e+00 : f32
    %7 = vector.broadcast %cst_7 : f32 to vector<16x32xf32>
    %8 = arith.maximumf %6, %7 : vector<16x32xf32>
    %c0_8 = arith.constant 0 : index
    %c0_9 = arith.constant 0 : index
    %9 = vector.load %arg5[%c0_8, %c0_9] : memref<32x256xf32, #tpu.memory_space<vmem>>, vector<32x256xf32>
    %cst_10 = arith.constant dense<0.000000e+00> : vector<16x256xf32>
    %10 = tpu.matmul %8, %9, %cst_10 {dimension_numbers = #tpu.dot_dimension_numbers<[1], [0], [0], [1], [0, 0, 1, 1], [], []>} : vector<16x32xf32>, vector<32x256xf32>, vector<16x256xf32> -> vector<16x256xf32>
    %cst_11 = arith.constant 0.000000e+00 : f32
    %11 = vector.broadcast %cst_11 : f32 to vector<16x256xf32>
    %12 = arith.maximumf %10, %11 : vector<16x256xf32>
    %c0_12 = arith.constant 0 : index
    %c0_13 = arith.constant 0 : index
    %c0_14 = arith.constant 0 : index
    %13 = vector.load %arg6[%c0_12, %c0_13, %c0_14] : memref<1x256x128xf32, #tpu.memory_space<vmem>>, vector<1x256x128xf32>
    %14 = vector.shape_cast %13 : vector<1x256x128xf32> to vector<256x128xf32>
    %cst_15 = arith.constant dense<0.000000e+00> : vector<16x128xf32>
    %15 = tpu.matmul %12, %14, %cst_15 {dimension_numbers = #tpu.dot_dimension_numbers<[1], [0], [0], [1], [0, 0, 1, 1], [], []>} : vector<16x256xf32>, vector<256x128xf32>, vector<16x128xf32> -> vector<16x128xf32>
    %c0_16 = arith.constant 0 : index
    %c0_17 = arith.constant 0 : index
    %c0_18 = arith.constant 0 : index
    %16 = vector.load %arg7[%c0_16, %c0_17, %c0_18] : memref<1x1x128xf32, #tpu.memory_space<vmem>>, vector<1x1x128xf32>
    %17 = vector.shape_cast %16 : vector<1x1x128xf32> to vector<1x128xf32>
    %18 = vector.broadcast %17 : vector<1x128xf32> to vector<16x128xf32>
    %19 = arith.addf %15, %18 : vector<16x128xf32>
    %20 = math.tanh %19 : vector<16x128xf32>
    %c0_19 = arith.constant 0 : index
    %c0_20 = arith.constant 0 : index
    %21 = vector.load %arg8[%c0_19, %c0_20] : memref<16x128xf32, #tpu.memory_space<vmem>>, vector<16x128xf32>
    tpu.vector_store %arg8[%c0_19, %c0_20], %20 {strides = array<i32>} : memref<16x128xf32, #tpu.memory_space<vmem>>, vector<16x128xf32>,
    return
  }
  func.func @transform_0(%arg0: i32, %arg1: memref<1xi32, #tpu.memory_space<smem>>) -> (i32, i32) {
    %c0_i32 = arith.constant 0 : i32
    %c0_i32_0 = arith.constant 0 : i32
    return %arg0, %c0_i32 : i32, i32
  }
  func.func @transform_1(%arg0: i32, %arg1: memref<1xi32, #tpu.memory_space<smem>>) -> (i32, i32) {
    %c0_i32 = arith.constant 0 : i32
    %c0_i32_0 = arith.constant 0 : i32
    %c0_i32_1 = arith.constant 0 : i32
    return %c0_i32, %c0_i32_0 : i32, i32
  }
  func.func @transform_2(%arg0: i32, %arg1: memref<1xi32, #tpu.memory_space<smem>>) -> (i32, i32) {
    %c0_i32 = arith.constant 0 : i32
    %c0_i32_0 = arith.constant 0 : i32
    %c0_i32_1 = arith.constant 0 : i32
    return %c0_i32, %c0_i32_0 : i32, i32
  }
  func.func @transform_3(%arg0: i32, %arg1: memref<1xi32, #tpu.memory_space<smem>>) -> (i32, i32) {
    %c0_i32 = arith.constant 0 : i32
    %c0_i32_0 = arith.constant 0 : i32
    %c0_i32_1 = arith.constant 0 : i32
    return %c0_i32, %c0_i32_0 : i32, i32
  }
  func.func @transform_4(%arg0: i32, %arg1: memref<1xi32, #tpu.memory_space<smem>>) -> (i32, i32, i32) {
    %c0 = arith.constant 0 : index
    %0 = memref.load %arg1[%c0] : memref<1xi32, #tpu.memory_space<smem>>
    %c0_i32 = arith.constant 0 : i32
    %c0_i32_0 = arith.constant 0 : i32
    %c0_i32_1 = arith.constant 0 : i32
    return %0, %c0_i32, %c0_i32_0 : i32, i32, i32
  }
  func.func @transform_5(%arg0: i32, %arg1: memref<1xi32, #tpu.memory_space<smem>>) -> (i32, i32, i32) {
    %c0 = arith.constant 0 : index
    %0 = memref.load %arg1[%c0] : memref<1xi32, #tpu.memory_space<smem>>
    %c0_i32 = arith.constant 0 : i32
    %c0_i32_0 = arith.constant 0 : i32
    %c0_i32_1 = arith.constant 0 : i32
    return %0, %c0_i32, %c0_i32_0 : i32, i32, i32
  }
  func.func @transform_6(%arg0: i32, %arg1: memref<1xi32, #tpu.memory_space<smem>>) -> (i32, i32) {
    %c0_i32 = arith.constant 0 : i32
    %c0_i32_0 = arith.constant 0 : i32
    return %arg0, %c0_i32 : i32, i32
  }
}

</mosaic_0001>

<llo_original>
// kernel: tpu_custom_call.1
$region0: #{tpu_custom_call.1}
  #allocation0 [shape = 'u32[]', space=smem, size = 0x4, offset = 0x4, fixed_abs, tag = 'smem constant byte address 0x4 - core index']
  #allocation1 [shape = 'u32[144,128]{1,0:T(1,128)}', space=vmem, size = 0x12000, scoped, tag = 'internal scratch']
  #allocation2 [shape = 's32[1]{0}', space=sflag, size = 0x4, scoped, tag = 'scoped memory for tpu_custom_call.1']
  #allocation3 [shape = 's32[1]{0:T(128)S(6)}', space=smem, size = 0x200, scoped, tag = 'prefetched SMEM operand 0']
  %s0 = inlined_call_operand.<no memory space> [shape: s32[1], index: 0, kind: input, shape index: {}]
  %s1 = inlined_call_operand.hbm [shape: f32[16,32], index: 1, kind: input, shape index: {}]
  %s2 = inlined_call_operand.hbm [shape: f32[32,32], index: 2, kind: input, shape index: {}]
  %s3 = inlined_call_operand.hbm [shape: f32[32,32], index: 3, kind: input, shape index: {}]
  %s4 = inlined_call_operand.hbm [shape: f32[32,256], index: 4, kind: input, shape index: {}]
  %s5 = inlined_call_operand.hbm [shape: f32[2,256,128], index: 5, kind: input, shape index: {}]
  %s6 = inlined_call_operand.vmem [shape: f32[2,1,128], index: 6, kind: input, shape index: {}]
  %s7 = inlined_call_operand.hbm [shape: f32[16,128], index: 7, kind: output, shape index: {}]
  %s8 = sld [smem:[#allocation0]]
  $region54: #{tpu_custom_call.1} parent=0
    _
  %s10 = ssub.s32 1, %s8
  %s11 = scalar_select 0, %s10, %s8
  %12 = sst [smem:[#allocation3]] %s0
  $region1: #{tpu_custom_call.1} parent=0
    #allocation4 [shape = 'u8[8192]{0}', space=vmem, size = 0x2000, scoped, tag = 'input window, operand 1, single buffered']
    #allocation5 [shape = 's32[1]{0}', space=sflag, size = 0x4, scoped, tag = 'scoped memory for tpu_custom_call.1']
    #allocation6 [shape = 's32[1]{0}', space=sflag, size = 0x4, scoped, tag = 'scoped memory for tpu_custom_call.1']
    #allocation7 [shape = 'u8[16384]{0}', space=vmem, size = 0x4000, scoped, tag = 'input window, operand 2, single buffered']
    #allocation8 [shape = 's32[1]{0}', space=sflag, size = 0x4, scoped, tag = 'scoped memory for tpu_custom_call.1']
    #allocation9 [shape = 'u8[16384]{0}', space=vmem, size = 0x4000, scoped, tag = 'input window, operand 3, single buffered']
    #allocation10 [shape = 'u8[32768]{0}', space=vmem, size = 0x8000, scoped, tag = 'input window, operand 4, single buffered']
    #allocation11 [shape = 's32[1]{0}', space=sflag, size = 0x4, scoped, tag = 'scoped memory for tpu_custom_call.1']
    #allocation12 [shape = 'u8[131072]{0}', space=vmem, size = 0x20000, scoped, tag = 'input window, operand 5, single buffered']
    #allocation13 [shape = 'u8[8192]{0}', space=vmem, size = 0x2000, scoped, tag = 'output window, operand 0, single buffered']
    %13 = vsyncpa [#allocation5], 0
    %14 = vsyncpa [#allocation8], 0
    %15 = vsyncpa [#allocation11], 0
    %16 = vsyncpa [#allocation6], 0
    // Predicated region
    $region2: #{tpu_custom_call.1} parent=1 // pred_check
      _
    $region3: #{tpu_custom_call.1} parent=1 // pred_check_branch
      %18 = sbr.rel (0) target = $region5
    $region4: #{tpu_custom_call.1} parent=1 // pred_region
      %s20 = ssub.s32 256, 256
      %21 = vsyncadd [#allocation5], %s20
      %s22 = sshll.u32 [#allocation4], 4
      %s23 = int_to_ptr.vmem [resolvable:$true] %s22
      %28 = dma.hbm_to_vmem [thread:$0]  %s1, 256, %s23, [#allocation5], 128, 128, 8
    $region5: #{tpu_custom_call.1} parent=1 // pred_fallthru
      _
    // Predicated region
    $region6: #{tpu_custom_call.1} parent=1 // pred_check
      _
    $region7: #{tpu_custom_call.1} parent=1 // pred_check_branch
      %30 = sbr.rel (0) target = $region9
    $region8: #{tpu_custom_call.1} parent=1 // pred_region
      %s32 = ssub.s32 512, 512
      %33 = vsyncadd [#allocation8], %s32
      %s34 = sshll.u32 [#allocation7], 4
      %s35 = int_to_ptr.vmem [resolvable:$true] %s34
      %40 = dma.hbm_to_vmem [thread:$0]  %s2, 512, %s35, [#allocation8], 128, 128, 8
    $region9: #{tpu_custom_call.1} parent=1 // pred_fallthru
      _
    // Predicated region
    $region10: #{tpu_custom_call.1} parent=1 // pred_check
      _
    $region11: #{tpu_custom_call.1} parent=1 // pred_check_branch
      %42 = sbr.rel (0) target = $region13
    $region12: #{tpu_custom_call.1} parent=1 // pred_region
      %s44 = ssub.s32 512, 512
      %45 = vsyncadd [#allocation8], %s44
      %s46 = sshll.u32 [#allocation9], 4
      %s47 = int_to_ptr.vmem [resolvable:$true] %s46
      %52 = dma.hbm_to_vmem [thread:$0]  %s3, 512, %s47, [#allocation8], 128, 128, 8
    $region13: #{tpu_custom_call.1} parent=1 // pred_fallthru
      _
    // Predicated region
    $region14: #{tpu_custom_call.1} parent=1 // pred_check
      _
    $region15: #{tpu_custom_call.1} parent=1 // pred_check_branch
      %54 = sbr.rel (0) target = $region17
    $region16: #{tpu_custom_call.1} parent=1 // pred_region
      %s56 = ssub.s32 1024, 1024
      %57 = vsyncadd [#allocation11], %s56
      %s58 = sshll.u32 [#allocation10], 4
      %s59 = int_to_ptr.vmem [resolvable:$true] %s58
      %64 = dma.hbm_to_vmem [thread:$0]  %s4, 1024, %s59, [#allocation11], 256, 256, 16
    $region17: #{tpu_custom_call.1} parent=1 // pred_fallthru
      _
    // Predicated region
    $region18: #{tpu_custom_call.1} parent=1 // pred_check
      _
    $region19: #{tpu_custom_call.1} parent=1 // pred_check_branch
      %66 = sbr.rel (0) target = $region21
    $region20: #{tpu_custom_call.1} parent=1 // pred_region
      %s67 = sld [smem:[#allocation3]]
      %s69 = ssub.s32 4096, 4096
      %70 = vsyncadd [#allocation11], %s69
      %s71 = smul.addr %s67, 32
      %s72 = smul.addr %s71, 128
      %s73 = scalar_lea.hbm %s5, %s72
      %s74 = sshll.u32 [#allocation12], 4
      %s75 = int_to_ptr.vmem [resolvable:$true] %s74
      %80 = dma.hbm_to_vmem [thread:$0]  %s73, 4096, %s75, [#allocation11], 128, 128, 8
    $region21: #{tpu_custom_call.1} parent=1 // pred_fallthru
      _
    // Predicated region
    $region22: #{tpu_custom_call.1} parent=1 // pred_check
      _
    $region23: #{tpu_custom_call.1} parent=1 // pred_check_branch
      %82 = sbr.rel (0) target = $region25
    $region24: #{tpu_custom_call.1} parent=1 // pred_region
      %s83 = sld [smem:[#allocation3]]
      %p84 = scmp.lt.s32.totalorder %s83, 1
      %s85 = scalar_select %p84, %s83, 1
      %s86 = scalar_lea.vmem %s6, %s85
      %s87 = sld [smem:[#allocation3]]
    $region25: #{tpu_custom_call.1} parent=1 // pred_fallthru
      _
    // Predicated region
    $region26: #{tpu_custom_call.1} parent=1 // pred_check
      _
    $region27: #{tpu_custom_call.1} parent=1 // pred_check_branch
      %89 = sbr.rel (0) target = $region29
    $region28: #{tpu_custom_call.1} parent=1 // pred_region
      %90 = dma.done [#allocation5], 256
    $region29: #{tpu_custom_call.1} parent=1 // pred_fallthru
      _
    // Predicated region
    $region30: #{tpu_custom_call.1} parent=1 // pred_check
      _
    $region31: #{tpu_custom_call.1} parent=1 // pred_check_branch
      %92 = sbr.rel (0) target = $region33
    $region32: #{tpu_custom_call.1} parent=1 // pred_region
      %93 = dma.done [#allocation8], 512
    $region33: #{tpu_custom_call.1} parent=1 // pred_fallthru
      _
    // Predicated region
    $region34: #{tpu_custom_call.1} parent=1 // pred_check
      _
    $region35: #{tpu_custom_call.1} parent=1 // pred_check_branch
      %95 = sbr.rel (0) target = $region37
    $region36: #{tpu_custom_call.1} parent=1 // pred_region
      %96 = dma.done [#allocation8], 512
    $region37: #{tpu_custom_call.1} parent=1 // pred_fallthru
      _
    // Predicated region
    $region38: #{tpu_custom_call.1} parent=1 // pred_check
      _
    $region39: #{tpu_custom_call.1} parent=1 // pred_check_branch
      %98 = sbr.rel (0) target = $region41
    $region40: #{tpu_custom_call.1} parent=1 // pred_region
      %99 = dma.done [#allocation11], 1024
    $region41: #{tpu_custom_call.1} parent=1 // pred_fallthru
      _
    // Predicated region
    $region42: #{tpu_custom_call.1} parent=1 // pred_check
      _
    $region43: #{tpu_custom_call.1} parent=1 // pred_check_branch
      %101 = sbr.rel (0) target = $region45
    $region44: #{tpu_custom_call.1} parent=1 // pred_region
      %102 = dma.done [#allocation11], 4096
    $region45: #{tpu_custom_call.1} parent=1 // pred_fallthru
      _
    %s103 = sld [smem:[#allocation3]]
    %p104 = scmp.lt.s32.totalorder %s103, 1
    %s105 = scalar_select %p104, %s103, 1
    %s106 = scalar_lea.vmem %s6, %s105
    %s107 = sld [smem:[#allocation3]]
    %s108 = sld [smem:[#allocation3]]
    %p109 = scmp.lt.s32.totalorder %s108, 1
    %s110 = scalar_select %p109, %s108, 1
    %s111 = scalar_lea.vmem %s6, %s110
    %s112 = sld [smem:[#allocation3]]
    %v113 = vld [vmem:[#allocation4] sm:$0xff]
    %v114 = vld [vmem:[#allocation4 + $0x8] sm:$0xff]
    %v115 = vld [vmem:[#allocation7] sm:$0xff]
    %v116 = vld [vmem:[#allocation7 + $0x8] sm:$0xff]
    %v117 = vld [vmem:[#allocation7 + $0x10] sm:$0xff]
    %v118 = vld [vmem:[#allocation7 + $0x18] sm:$0xff]
    %vm119 = vcmask 261120
    %v121 = vsel %vm119, %v113, 0
    %v124 = vsel %vm119, %v114, 0
    %126 = vmatprep.subr.mxu0 0.0
    %127 = vmatpush1.msra.mxu0 0.0
    %128 = vmatprep.subr.mxu0 0.0
    %129 = vmatpush1.msra.mxu0 0.0
    %130 = vmatprep.subr.mxu0 0.0
    %131 = vmatpush1.msra.mxu0 0.0
    %132 = vmatprep.subr.mxu0 0.0
    %133 = vmatpush1.msra.mxu0 0.0
    %134 = vmatprep.subr.mxu0 0.0
    %135 = vmatpush1.msra.mxu0 0.0
    %136 = vmatprep.subr.mxu0 0.0
    %137 = vmatpush1.msra.mxu0 0.0
    %138 = vmatprep.subr.mxu0 0.0
    %139 = vmatpush1.msra.mxu0 0.0
    %140 = vmatprep.subr.mxu0 0.0
    %141 = vmatpush1.msra.mxu0 0.0
    %142 = vmatprep.subr.mxu0 0.0
    %143 = vmatpush1.msra.mxu0 0.0
    %144 = vmatprep.subr.mxu0 0.0
    %145 = vmatpush1.msra.mxu0 0.0
    %146 = vmatprep.subr.mxu0 0.0
    %147 = vmatpush1.msra.mxu0 0.0
    %148 = vmatprep.subr.mxu0 0.0
    %149 = vmatpush1.msra.mxu0 0.0
    %150 = vmatprep.subr.mxu0 0.0
    %151 = vmatpush1.msra.mxu0 %v118
    %152 = vmatprep.subr.mxu0 0.0
    %153 = vmatpush1.msra.mxu0 %v117
    %154 = vmatprep.subr.mxu0 0.0
    %155 = vmatpush1.msra.mxu0 %v116
    %156 = vmatprep.subr.mxu0 0.0
    %157 = vmatpush1.msra.mxu0 %v115
    %158 = vmatprep.subr.mxu0 0.0
    %159 = vmatpush2.msra.mxu0 0.0
    %160 = vmatprep.subr.mxu0 0.0
    %161 = vmatpush2.msra.mxu0 0.0
    %162 = vmatprep.subr.mxu0 0.0
    %163 = vmatpush2.msra.mxu0 0.0
    %164 = vmatprep.subr.mxu0 0.0
    %165 = vmatpush2.msra.mxu0 0.0
    %166 = vmatprep.subr.mxu0 0.0
    %167 = vmatpush2.msra.mxu0 0.0
    %168 = vmatprep.subr.mxu0 0.0
    %169 = vmatpush2.msra.mxu0 0.0
    %170 = vmatprep.subr.mxu0 0.0
    %171 = vmatpush2.msra.mxu0 0.0
    %172 = vmatprep.subr.mxu0 0.0
    %173 = vmatpush2.msra.mxu0 0.0
    %174 = vmatprep.subr.mxu0 0.0
    %175 = vmatpush2.msra.mxu0 0.0
    %176 = vmatprep.subr.mxu0 0.0
    %177 = vmatpush2.msra.mxu0 0.0
    %178 = vmatprep.subr.mxu0 0.0
    %179 = vmatpush2.msra.mxu0 0.0
    %180 = vmatprep.subr.mxu0 0.0
    %181 = vmatpush2.msra.mxu0 0.0
    %182 = vmatprep.subr.mxu0 0.0
    %183 = vmatpush2.msra.mxu0 0.0
    %184 = vmatprep.subr.mxu0 0.0
    %185 = vmatpush2.msra.mxu0 0.0
    %186 = vmatprep.subr.mxu0 0.0
    %187 = vmatpush2.msra.mxu0 0.0
    %188 = vmatprep.subr.mxu0 0.0
    %189 = vmatpush2.msra.mxu0 0.0
    %190 = vmatprep.mubr.f32.mxu0 0.0
    %191 = vmatmul.mubr.f32.gmra.mxu0 %v121
    %v192 = vpop.f32.mrf.mxu0
    %v193 = vadd.f32 0.0, %v192
    %v194 = vpop.f32.mrf.mxu0
    %195 = vmatprep.mubr.f32.mxu0 0.0
    %196 = vmatmul.mubr.f32.gmra.mxu0 %v124
    %v197 = vpop.f32.mrf.mxu0
    %v198 = vadd.f32 0.0, %v197
    %v199 = vpop.f32.mrf.mxu0
    %200 = vdwg.mxu0
    %v201 = vmax.f32 %v193, 0.0
    %v202 = vmax.f32 %v198, 0.0
    %v203 = vld [vmem:[#allocation9] sm:$0xff]
    %v204 = vld [vmem:[#allocation9 + $0x8] sm:$0xff]
    %v205 = vld [vmem:[#allocation9 + $0x10] sm:$0xff]
    %v206 = vld [vmem:[#allocation9 + $0x18] sm:$0xff]
    %v208 = vsel %vm119, %v201, 0
    %v211 = vsel %vm119, %v202, 0
    %213 = vmatprep.subr.mxu0 0.0
    %214 = vmatpush1.msra.mxu0 0.0
    %215 = vmatprep.subr.mxu0 0.0
    %216 = vmatpush1.msra.mxu0 0.0
    %217 = vmatprep.subr.mxu0 0.0
    %218 = vmatpush1.msra.mxu0 0.0
    %219 = vmatprep.subr.mxu0 0.0
    %220 = vmatpush1.msra.mxu0 0.0
    %221 = vmatprep.subr.mxu0 0.0
    %222 = vmatpush1.msra.mxu0 0.0
    %223 = vmatprep.subr.mxu0 0.0
    %224 = vmatpush1.msra.mxu0 0.0
    %225 = vmatprep.subr.mxu0 0.0
    %226 = vmatpush1.msra.mxu0 0.0
    %227 = vmatprep.subr.mxu0 0.0
    %228 = vmatpush1.msra.mxu0 0.0
    %229 = vmatprep.subr.mxu0 0.0
    %230 = vmatpush1.msra.mxu0 0.0
    %231 = vmatprep.subr.mxu0 0.0
    %232 = vmatpush1.msra.mxu0 0.0
    %233 = vmatprep.subr.mxu0 0.0
    %234 = vmatpush1.msra.mxu0 0.0
    %235 = vmatprep.subr.mxu0 0.0
    %236 = vmatpush1.msra.mxu0 0.0
    %237 = vmatprep.subr.mxu0 0.0
    %238 = vmatpush1.msra.mxu0 %v206
    %239 = vmatprep.subr.mxu0 0.0
    %240 = vmatpush1.msra.mxu0 %v205
    %241 = vmatprep.subr.mxu0 0.0
    %242 = vmatpush1.msra.mxu0 %v204
    %243 = vmatprep.subr.mxu0 0.0
    %244 = vmatpush1.msra.mxu0 %v203
    %245 = vmatprep.subr.mxu0 0.0
    %246 = vmatpush2.msra.mxu0 0.0
    %247 = vmatprep.subr.mxu0 0.0
    %248 = vmatpush2.msra.mxu0 0.0
    %249 = vmatprep.subr.mxu0 0.0
    %250 = vmatpush2.msra.mxu0 0.0
    %251 = vmatprep.subr.mxu0 0.0
    %252 = vmatpush2.msra.mxu0 0.0
    %253 = vmatprep.subr.mxu0 0.0
    %254 = vmatpush2.msra.mxu0 0.0
    %255 = vmatprep.subr.mxu0 0.0
    %256 = vmatpush2.msra.mxu0 0.0
    %257 = vmatprep.subr.mxu0 0.0
    %258 = vmatpush2.msra.mxu0 0.0
    %259 = vmatprep.subr.mxu0 0.0
    %260 = vmatpush2.msra.mxu0 0.0
    %261 = vmatprep.subr.mxu0 0.0
    %262 = vmatpush2.msra.mxu0 0.0
    %263 = vmatprep.subr.mxu0 0.0
    %264 = vmatpush2.msra.mxu0 0.0
    %265 = vmatprep.subr.mxu0 0.0
    %266 = vmatpush2.msra.mxu0 0.0
    %267 = vmatprep.subr.mxu0 0.0
    %268 = vmatpush2.msra.mxu0 0.0
    %269 = vmatprep.subr.mxu0 0.0
    %270 = vmatpush2.msra.mxu0 0.0
    %271 = vmatprep.subr.mxu0 0.0
    %272 = vmatpush2.msra.mxu0 0.0
    %273 = vmatprep.subr.mxu0 0.0
    %274 = vmatpush2.msra.mxu0 0.0
    %275 = vmatprep.subr.mxu0 0.0
    %276 = vmatpush2.msra.mxu0 0.0
    %277 = vmatprep.mubr.f32.mxu0 0.0
    %278 = vmatmul.mubr.f32.gmra.mxu0 %v208
    %v279 = vpop.f32.mrf.mxu0
    %v280 = vadd.f32 0.0, %v279
    %v281 = vpop.f32.mrf.mxu0
    %282 = vmatprep.mubr.f32.mxu0 0.0
    %283 = vmatmul.mubr.f32.gmra.mxu0 %v211
    %v284 = vpop.f32.mrf.mxu0
    %v285 = vadd.f32 0.0, %v284
    %v286 = vpop.f32.mrf.mxu0
    %287 = vdwg.mxu0
    %v288 = vmax.f32 %v280, 0.0
    %v289 = vmax.f32 %v285, 0.0
    %v290 = vld [vmem:[#allocation10] sm:$0xff]
    %v291 = vld [vmem:[#allocation10 + $0x8] sm:$0xff]
    %v292 = vld [vmem:[#allocation10 + $0x10] sm:$0xff]
    %v293 = vld [vmem:[#allocation10 + $0x18] sm:$0xff]
    %v294 = vld [vmem:[#allocation10 + $0x20] sm:$0xff]
    %v295 = vld [vmem:[#allocation10 + $0x28] sm:$0xff]
    %v296 = vld [vmem:[#allocation10 + $0x30] sm:$0xff]
    %v297 = vld [vmem:[#allocation10 + $0x38] sm:$0xff]
    %v299 = vsel %vm119, %v288, 0
    %v302 = vsel %vm119, %v289, 0
    %304 = vmatprep.subr.mxu0 0.0
    %305 = vmatpush1.msra.mxu0 0.0
    %306 = vmatprep.subr.mxu0 0.0
    %307 = vmatpush1.msra.mxu0 0.0
    %308 = vmatprep.subr.mxu0 0.0
    %309 = vmatpush1.msra.mxu0 0.0
    %310 = vmatprep.subr.mxu0 0.0
    %311 = vmatpush1.msra.mxu0 0.0
    %312 = vmatprep.subr.mxu0 0.0
    %313 = vmatpush1.msra.mxu0 0.0
    %314 = vmatprep.subr.mxu0 0.0
    %315 = vmatpush1.msra.mxu0 0.0
    %316 = vmatprep.subr.mxu0 0.0
    %317 = vmatpush1.msra.mxu0 0.0
    %318 = vmatprep.subr.mxu0 0.0
    %319 = vmatpush1.msra.mxu0 0.0
    %320 = vmatprep.subr.mxu0 0.0
    %321 = vmatpush1.msra.mxu0 0.0
    %322 = vmatprep.subr.mxu0 0.0
    %323 = vmatpush1.msra.mxu0 0.0
    %324 = vmatprep.subr.mxu0 0.0
    %325 = vmatpush1.msra.mxu0 0.0
    %326 = vmatprep.subr.mxu0 0.0
    %327 = vmatpush1.msra.mxu0 0.0
    %328 = vmatprep.subr.mxu0 %v297
    %329 = vmatpush1.msra.mxu0 %v296
    %330 = vmatprep.subr.mxu0 %v295
    %331 = vmatpush1.msra.mxu0 %v294
    %332 = vmatprep.subr.mxu0 %v293
    %333 = vmatpush1.msra.mxu0 %v292
    %334 = vmatprep.subr.mxu0 %v291
    %335 = vmatpush1.msra.mxu0 %v290
    %336 = vmatprep.subr.mxu0 0.0
    %337 = vmatpush2.msra.mxu0 0.0
    %338 = vmatprep.subr.mxu0 0.0
    %339 = vmatpush2.msra.mxu0 0.0
    %340 = vmatprep.subr.mxu0 0.0
    %341 = vmatpush2.msra.mxu0 0.0
    %342 = vmatprep.subr.mxu0 0.0
    %343 = vmatpush2.msra.mxu0 0.0
    %344 = vmatprep.subr.mxu0 0.0
    %345 = vmatpush2.msra.mxu0 0.0
    %346 = vmatprep.subr.mxu0 0.0
    %347 = vmatpush2.msra.mxu0 0.0
    %348 = vmatprep.subr.mxu0 0.0
    %349 = vmatpush2.msra.mxu0 0.0
    %350 = vmatprep.subr.mxu0 0.0
    %351 = vmatpush2.msra.mxu0 0.0
    %352 = vmatprep.subr.mxu0 0.0
    %353 = vmatpush2.msra.mxu0 0.0
    %354 = vmatprep.subr.mxu0 0.0
    %355 = vmatpush2.msra.mxu0 0.0
    %356 = vmatprep.subr.mxu0 0.0
    %357 = vmatpush2.msra.mxu0 0.0
    %358 = vmatprep.subr.mxu0 0.0
    %359 = vmatpush2.msra.mxu0 0.0
    %360 = vmatprep.subr.mxu0 0.0
    %361 = vmatpush2.msra.mxu0 0.0
    %362 = vmatprep.subr.mxu0 0.0
    %363 = vmatpush2.msra.mxu0 0.0
    %364 = vmatprep.subr.mxu0 0.0
    %365 = vmatpush2.msra.mxu0 0.0
    %366 = vmatprep.subr.mxu0 0.0
    %367 = vmatpush2.msra.mxu0 0.0
    %368 = vmatprep.mubr.f32.mxu0 0.0
    %369 = vmatmul.mubr.f32.gmra.mxu0 %v299
    %v370 = vpop.f32.mrf.mxu0
    %v371 = vadd.f32 0.0, %v370
    %v372 = vpop.f32.mrf.mxu0
    %v373 = vadd.f32 0.0, %v372
    %374 = vmatprep.mubr.f32.mxu0 0.0
    %375 = vmatmul.mubr.f32.gmra.mxu0 %v302
    %v376 = vpop.f32.mrf.mxu0
    %v377 = vadd.f32 0.0, %v376
    %v378 = vpop.f32.mrf.mxu0
    %v379 = vadd.f32 0.0, %v378
    %380 = vdwg.mxu0
    %v381 = vmax.f32 %v371, 0.0
    %v382 = vmax.f32 %v373, 0.0
    %v383 = vmax.f32 %v377, 0.0
    %v384 = vmax.f32 %v379, 0.0
    %v385 = vld [vmem:[#allocation12] sm:$0xff]
    %v386 = vld [vmem:[#allocation12 + $0x8] sm:$0xff]
    %v387 = vld [vmem:[#allocation12 + $0x10] sm:$0xff]
    %v388 = vld [vmem:[#allocation12 + $0x18] sm:$0xff]
    %v389 = vld [vmem:[#allocation12 + $0x20] sm:$0xff]
    %v390 = vld [vmem:[#allocation12 + $0x28] sm:$0xff]
    %v391 = vld [vmem:[#allocation12 + $0x30] sm:$0xff]
    %v392 = vld [vmem:[#allocation12 + $0x38] sm:$0xff]
    %v393 = vld [vmem:[#allocation12 + $0x40] sm:$0xff]
    %v394 = vld [vmem:[#allocation12 + $0x48] sm:$0xff]
    %v395 = vld [vmem:[#allocation12 + $0x50] sm:$0xff]
    %v396 = vld [vmem:[#allocation12 + $0x58] sm:$0xff]
    %v397 = vld [vmem:[#allocation12 + $0x60] sm:$0xff]
    %v398 = vld [vmem:[#allocation12 + $0x68] sm:$0xff]
    %v399 = vld [vmem:[#allocation12 + $0x70] sm:$0xff]
    %v400 = vld [vmem:[#allocation12 + $0x78] sm:$0xff]
    %v401 = vld [vmem:[#allocation12 + $0x80] sm:$0xff]
    %v402 = vld [vmem:[#allocation12 + $0x88] sm:$0xff]
    %v403 = vld [vmem:[#allocation12 + $0x90] sm:$0xff]
    %v404 = vld [vmem:[#allocation12 + $0x98] sm:$0xff]
    %v405 = vld [vmem:[#allocation12 + $0xa0] sm:$0xff]
    %v406 = vld [vmem:[#allocation12 + $0xa8] sm:$0xff]
    %v407 = vld [vmem:[#allocation12 + $0xb0] sm:$0xff]
    %v408 = vld [vmem:[#allocation12 + $0xb8] sm:$0xff]
    %v409 = vld [vmem:[#allocation12 + $0xc0] sm:$0xff]
    %v410 = vld [vmem:[#allocation12 + $0xc8] sm:$0xff]
    %v411 = vld [vmem:[#allocation12 + $0xd0] sm:$0xff]
    %v412 = vld [vmem:[#allocation12 + $0xd8] sm:$0xff]
    %v413 = vld [vmem:[#allocation12 + $0xe0] sm:$0xff]
    %v414 = vld [vmem:[#allocation12 + $0xe8] sm:$0xff]
    %v415 = vld [vmem:[#allocation12 + $0xf0] sm:$0xff]
    %v416 = vld [vmem:[#allocation12 + $0xf8] sm:$0xff]
    %v417 = vld [vmem:[%s111] sm:$0x1]
    %v419 = vlaneseq
    %v420 = vshrl.u32 %v419, 7
    %v421 = vsub.s32 0, %v420
    %v422 = vrot.slane %v417, %v421
    %424 = vmatprep.subr.mxu0 0.0
    %425 = vmatpush1.msra.mxu0 %v400
    %426 = vmatprep.subr.mxu0 0.0
    %427 = vmatpush1.msra.mxu0 %v399
    %428 = vmatprep.subr.mxu0 0.0
    %429 = vmatpush1.msra.mxu0 %v398
    %430 = vmatprep.subr.mxu0 0.0
    %431 = vmatpush1.msra.mxu0 %v397
    %432 = vmatprep.subr.mxu0 0.0
    %433 = vmatpush1.msra.mxu0 %v396
    %434 = vmatprep.subr.mxu0 0.0
    %435 = vmatpush1.msra.mxu0 %v395
    %436 = vmatprep.subr.mxu0 0.0
    %437 = vmatpush1.msra.mxu0 %v394
    %438 = vmatprep.subr.mxu0 0.0
    %439 = vmatpush1.msra.mxu0 %v393
    %440 = vmatprep.subr.mxu0 0.0
    %441 = vmatpush1.msra.mxu0 %v392
    %442 = vmatprep.subr.mxu0 0.0
    %443 = vmatpush1.msra.mxu0 %v391
    %444 = vmatprep.subr.mxu0 0.0
    %445 = vmatpush1.msra.mxu0 %v390
    %446 = vmatprep.subr.mxu0 0.0
    %447 = vmatpush1.msra.mxu0 %v389
    %448 = vmatprep.subr.mxu0 0.0
    %449 = vmatpush1.msra.mxu0 %v388
    %450 = vmatprep.subr.mxu0 0.0
    %451 = vmatpush1.msra.mxu0 %v387
    %452 = vmatprep.subr.mxu0 0.0
    %453 = vmatpush1.msra.mxu0 %v386
    %454 = vmatprep.subr.mxu0 0.0
    %455 = vmatpush1.msra.mxu0 %v385
    %456 = vmatprep.subr.mxu0 0.0
    %457 = vmatpush2.msra.mxu0 %v416
    %458 = vmatprep.subr.mxu0 0.0
    %459 = vmatpush2.msra.mxu0 %v415
    %460 = vmatprep.subr.mxu0 0.0
    %461 = vmatpush2.msra.mxu0 %v414
    %462 = vmatprep.subr.mxu0 0.0
    %463 = vmatpush2.msra.mxu0 %v413
    %464 = vmatprep.subr.mxu0 0.0
    %465 = vmatpush2.msra.mxu0 %v412
    %466 = vmatprep.subr.mxu0 0.0
    %467 = vmatpush2.msra.mxu0 %v411
    %468 = vmatprep.subr.mxu0 0.0
    %469 = vmatpush2.msra.mxu0 %v410
    %470 = vmatprep.subr.mxu0 0.0
    %471 = vmatpush2.msra.mxu0 %v409
    %472 = vmatprep.subr.mxu0 0.0
    %473 = vmatpush2.msra.mxu0 %v408
    %474 = vmatprep.subr.mxu0 0.0
    %475 = vmatpush2.msra.mxu0 %v407
    %476 = vmatprep.subr.mxu0 0.0
    %477 = vmatpush2.msra.mxu0 %v406
    %478 = vmatprep.subr.mxu0 0.0
    %479 = vmatpush2.msra.mxu0 %v405
    %480 = vmatprep.subr.mxu0 0.0
    %481 = vmatpush2.msra.mxu0 %v404
    %482 = vmatprep.subr.mxu0 0.0
    %483 = vmatpush2.msra.mxu0 %v403
    %484 = vmatprep.subr.mxu0 0.0
    %485 = vmatpush2.msra.mxu0 %v402
    %486 = vmatprep.subr.mxu0 0.0
    %487 = vmatpush2.msra.mxu0 %v401
    %488 = vmatprep.mubr.f32.mxu0 %v382
    %489 = vmatmul.mubr.f32.gmra.mxu0 %v381
    %v490 = vpop.f32.mrf.mxu0
    %v491 = vadd.f32 %v422, %v490
    %v492 = vpop.f32.mrf.mxu0
    %493 = vmatprep.mubr.f32.mxu0 %v384
    %494 = vmatmul.mubr.f32.gmra.mxu0 %v383
    %v495 = vpop.f32.mrf.mxu0
    %v496 = vadd.f32 %v422, %v495
    %v497 = vpop.f32.mrf.mxu0
    %498 = vdwg.mxu0
    %v499 = vtanh.pop %v491
    %v500 = vtanh.pop %v496
    %501 = vst [vmem:[#allocation13] sm:$0xff] %v499
    %502 = vst [vmem:[#allocation13 + $0x8] sm:$0xff] %v500
    // Predicated region
    $region46: #{tpu_custom_call.1} parent=1 // pred_check
      _
    $region47: #{tpu_custom_call.1} parent=1 // pred_check_branch
      %504 = sbr.rel (0) target = $region49
    $region48: #{tpu_custom_call.1} parent=1 // pred_region
      %s506 = ssub.s32 256, 256
      %507 = vsyncadd [#allocation6], %s506
      %s508 = sshll.u32 [#allocation13], 4
      %s509 = int_to_ptr.vmem [resolvable:$true] %s508
      %514 = dma.vmem_to_hbm [thread:$0]  %s509, 256, %s7, [#allocation6], 128, 128, 8
    $region49: #{tpu_custom_call.1} parent=1 // pred_fallthru
      _
    // Predicated region
    $region50: #{tpu_custom_call.1} parent=1 // pred_check
      _
    $region51: #{tpu_custom_call.1} parent=1 // pred_check_branch
      %516 = sbr.rel (0) target = $region53
    $region52: #{tpu_custom_call.1} parent=1 // pred_region
      %517 = dma.done [#allocation6], 256
    $region53: #{tpu_custom_call.1} parent=1 // pred_fallthru
      _
    %518 = vsyncpa [#allocation5], 1
    %519 = vsyncpa [#allocation8], 1
    %520 = vsyncpa [#allocation11], 1
    %521 = vsyncpa [#allocation6], 1

</llo_original>
